<compile_context>
chip_gen: v7x
topology: tpu7x:2x2x1
jax: 0.10.0
libtpu: 0.0.40
codegen_flags: <defaults>
</compile_context>

<pallas_src>
from functools import partial

import numpy as np
import jax
import jax.numpy as jnp
from jax.experimental import pallas as pl
from jax.experimental.pallas import tpu as pltpu

HIDDEN = 32
L_LAYERS = 2           # n_layers_features_extractor
N_MLP = 2              # n_mlp_layers_features_extractor
EDGE_RAW_DIM = 4       # raw edge feature dim fed to the edge embedder
EDGE_RAW_PAD = 16      # padded (sublane-aligned) raw edge dim
LANES = 128            # lane-dense width for all slabs / outputs
AGG_FIN = 48           # padded input width for aggregator kernels

_F32 = jnp.float32
_BF16 = jnp.bfloat16

# Packed weight-slab row offsets (all multiples of 16 -> bf16-tile aligned).
_C_WS0, _C_WS1 = 0, 32          # conv: W_self
_C_WM0, _C_WM1 = 32, 96         # conv: [W_msg; W_edge]
_C_W10, _C_W11 = 96, 224        # conv: MLP W1 (padded to 128 rows)
_C_W20, _C_W21 = 224, 352       # conv: MLP W2 (+ folded scorer column)
_A_WM0, _A_WM1 = 0, 48          # aggr: W_msg (pre-linear folded)
_A_W10, _A_W11 = 48, 176        # aggr: MLP W1
_A_W20, _A_W21 = 176, 304       # aggr: MLP W2
_E_W10, _E_W11 = 0, 16          # edge-embed: W1
_E_W20, _E_W21 = 16, 144        # edge-embed: W2


def _bs(shape):
    """Full-array BlockSpec for a grid=(1,) call (block == whole array)."""
    rank = len(shape)
    return pl.BlockSpec(shape, lambda i, _r=rank: (0,) * _r)


def _nbytes(*arrs):
    return sum(int(np.prod(a.shape)) * np.dtype(a.dtype).itemsize for a in arrs)


def _cparams(total_io_bytes):
    # Explicit VMEM limit derived from actual per-call buffer sizes (+margin),
    # capped below v7x physical VMEM.
    limit = int(min(64 << 20, max(16 << 20, 6 * total_io_bytes)))
    return pltpu.CompilerParams(dimension_semantics=("arbitrary",),
                                vmem_limit_bytes=limit)


# ----------------------------------------------------------------------------
# Pallas kernels
# ----------------------------------------------------------------------------
def _mlp2_kernel(x_ref, w_ref, b_ref, o_ref):
    """Edge embedder: gelu(x@W1+b1)@W2 + b2 — packed weight slab, 128-lane out."""
    bs = b_ref[...]
    h = jax.nn.gelu(jnp.dot(x_ref[...].astype(_BF16), w_ref[_E_W10:_E_W11, :],
                            preferred_element_type=_F32) + bs[0:1, :])
    o_ref[...] = jnp.dot(h.astype(_BF16), w_ref[_E_W20:_E_W21, :],
                         preferred_element_type=_F32) + bs[1:2, :]


def _conv_mlp_kernel(x_ref, xe_ref, dst_ref, w_ref, b_ref, o_ref):
    """Fused GraphConv + 2-layer MLP (+ scorer folded into W2 column 32).

    conv: y = X@Ws + OneHot(dst) @ (concat([Xsrc,E]) @ Wme) + b
    mlp : out = gelu(y@W1+b1)@W2p + b2p   (W2p col 32 = W2@lin_w for the scorer)
    """
    n = x_ref.shape[0]
    E = xe_ref.shape[0]
    bs = b_ref[...]

    msg = jnp.dot(xe_ref[...].astype(_BF16), w_ref[_C_WM0:_C_WM1, :],
                  preferred_element_type=_F32)
    onehot = (jax.lax.broadcasted_iota(jnp.int32, (n, E), 0)
              == dst_ref[...]).astype(_BF16)
    agg = jnp.dot(onehot, msg.astype(_BF16), preferred_element_type=_F32)

    y = jnp.dot(x_ref[...].astype(_BF16), w_ref[_C_WS0:_C_WS1, :],
                preferred_element_type=_F32) + agg + bs[0:1, :]

    h = jax.nn.gelu(jnp.dot(y.astype(_BF16), w_ref[_C_W10:_C_W11, :],
                            preferred_element_type=_F32) + bs[1:2, :])
    o_ref[...] = jnp.dot(h.astype(_BF16), w_ref[_C_W20:_C_W21, :],
                         preferred_element_type=_F32) + bs[2:3, :]


def _aggr_kernel(f_ref, idx_ref, w_ref, b_ref, o_ref):
    """Fused Node/Edge aggregator (pre-linear + self-term folded into slabs).

    msg  = f @ Wm + bmsg            (bmsg = ScoreAggr bias @ Wm, per-node)
    y    = OneHot(idx) @ msg + selfbias   (selfbias = emb@Ws + b, precomputed)
    out  = gelu(y@W1+b1)@W2 + b2
    """
    c = o_ref.shape[0]
    ns = f_ref.shape[0]
    bs = b_ref[...]

    msg = jnp.dot(f_ref[...].astype(_BF16), w_ref[_A_WM0:_A_WM1, :],
                  preferred_element_type=_F32) + bs[0:1, :]
    onehot = (jax.lax.broadcasted_iota(jnp.int32, (c, ns), 0)
              == idx_ref[...]).astype(_BF16)
    agg = jnp.dot(onehot, msg.astype(_BF16), preferred_element_type=_F32)

    y = agg + bs[1:2, :]
    h = jax.nn.gelu(jnp.dot(y.astype(_BF16), w_ref[_A_W10:_A_W11, :],
                            preferred_element_type=_F32) + bs[2:3, :])
    o_ref[...] = jnp.dot(h.astype(_BF16), w_ref[_A_W20:_A_W21, :],
                         preferred_element_type=_F32) + bs[3:4, :]


# ----------------------------------------------------------------------------
# pallas_call wrappers (traced inside jitted segments)
# ----------------------------------------------------------------------------
def _call_mlp2(x, w, b):
    E = x.shape[0]
    total = _nbytes(x, w, b) + E * LANES * 4
    return pl.pallas_call(
        _mlp2_kernel,
        out_shape=jax.ShapeDtypeStruct((E, LANES), _F32),
        grid=(1,),
        in_specs=[_bs(x.shape), _bs(w.shape), _bs(b.shape)],
        out_specs=_bs((E, LANES)),
        compiler_params=_cparams(total),
    )(x, w, b)


def _call_conv_mlp(x, xe, dst_row, w, b):
    n, E = x.shape[0], xe.shape[0]
    total = _nbytes(x, xe, dst_row, w, b) + n * LANES * 4 + n * E * 8
    return pl.pallas_call(
        _conv_mlp_kernel,
        out_shape=jax.ShapeDtypeStruct((n, LANES), _F32),
        grid=(1,),
        in_specs=[_bs(x.shape), _bs(xe.shape), _bs(dst_row.shape),
                  _bs(w.shape), _bs(b.shape)],
        out_specs=_bs((n, LANES)),
        compiler_params=_cparams(total),
    )(x, xe, dst_row, w, b)


def _call_aggr(f, idx_row, w, b, c):
    ns = f.shape[0]
    total = _nbytes(f, idx_row, w, b) + c * LANES * 4 + c * ns * 8
    return pl.pallas_call(
        _aggr_kernel,
        out_shape=jax.ShapeDtypeStruct((c, LANES), _F32),
        grid=(1,),
        in_specs=[_bs(f.shape), _bs(idx_row.shape), _bs(w.shape), _bs(b.shape)],
        out_specs=_bs((c, LANES)),
        compiler_params=_cparams(total),
    )(f, idx_row, w, b)


# ----------------------------------------------------------------------------
# Jitted device segments (all glue ops fused; no eager dispatch in between)
# ----------------------------------------------------------------------------
@jax.jit
def _seg_embed_conv0(edge_raw, x, src, dst_row, p_embed, p_conv):
    er = jnp.pad(edge_raw, ((0, 0), (0, EDGE_RAW_PAD - edge_raw.shape[1])))
    ef = _call_mlp2(er, p_embed["w"], p_embed["b"])[:, :HIDDEN]
    x_src = jnp.take(x, src, axis=0)
    xe = jnp.concatenate([x_src, ef], axis=-1)
    out = _call_conv_mlp(x, xe, dst_row, p_conv["w"], p_conv["b"])
    x1 = out[:, :HIDDEN]
    score = jax.nn.sigmoid(out[:, HIDDEN:HIDDEN + 1])   # folded scorer column
    return x1, score, ef


@partial(jax.jit, static_argnames=("c", "nu", "with_score"))
def _seg_pool_level(x, score, ef, cluster_row, uinv_row, src_new, dst_new_row,
                    p_eaggr, p_naggr, p_conv, *, c, nu, with_score):
    ns = x.shape[0]
    # EdgeAggr on fine-graph edge features -> coarse edge attributes.
    f_e = jnp.pad(ef, ((0, 0), (0, AGG_FIN - ef.shape[1])))
    new_ea = _call_aggr(f_e, uinv_row, p_eaggr["w"], p_eaggr["b"], nu)[:, :HIDDEN]
    # NodeAggr (ScoreAggr pre-linear folded into the message W).
    f_n = jnp.concatenate(
        [x, score, jnp.zeros((ns, AGG_FIN - HIDDEN - 1), _F32)], axis=-1)
    x_pool = _call_aggr(f_n, cluster_row, p_naggr["w"], p_naggr["b"], c)[:, :HIDDEN]
    # Down conv + MLP (+ fused scorer of the next pool) on the coarse graph.
    x_src = jnp.take(x_pool, src_new, axis=0)
    xe = jnp.concatenate([x_src, new_ea], axis=-1)
    out = _call_conv_mlp(x_pool, xe, dst_new_row, p_conv["w"], p_conv["b"])
    x_new = out[:, :HIDDEN]
    score_new = jax.nn.sigmoid(out[:, HIDDEN:HIDDEN + 1]) if with_score else None
    return x_new, score_new, new_ea


@jax.jit
def _seg_up(x_coarse, res, perm, src, dst_row, ef, p_conv):
    up = jnp.zeros_like(res).at[perm].set(x_coarse)     # sum_res residual scatter
    x = res + up
    x_src = jnp.take(x, src, axis=0)
    xe = jnp.concatenate([x_src, ef], axis=-1)
    out = _call_conv_mlp(x, xe, dst_row, p_conv["w"], p_conv["b"])
    return out[:, :HIDDEN]


@jax.jit
def _seg_conv(x, src, dst_row, ef, p_conv):
    x_src = jnp.take(x, src, axis=0)
    xe = jnp.concatenate([x_src, ef], axis=-1)
    out = _call_conv_mlp(x, xe, dst_row, p_conv["w"], p_conv["b"])
    return out[:, :HIDDEN]


# ----------------------------------------------------------------------------
# Parameter packing (once, at prep time): lane-dense bf16 weight slabs
# ----------------------------------------------------------------------------
def _padc(w, rows):
    w = jnp.asarray(w, _F32)
    return jnp.pad(w, ((0, rows - w.shape[0]), (0, LANES - w.shape[1])))


def _pack_mlp2(mlp_p):
    (w1, b1), (w2, b2) = mlp_p
    wslab = jnp.concatenate([_padc(w1, _E_W11 - _E_W10),
                             _padc(w2, _E_W21 - _E_W20)], axis=0).astype(_BF16)
    bslab = jnp.zeros((8, LANES), _F32)
    bslab = bslab.at[0, :w1.shape[1]].set(jnp.asarray(b1, _F32))
    bslab = bslab.at[1, :w2.shape[1]].set(jnp.asarray(b2, _F32))
    return {"w": wslab, "b": bslab}


def _pack_conv_mlp(conv_p, mlp_p, scorer=None):
    ws = jnp.asarray(conv_p["w_self"], _F32)
    wme = jnp.concatenate([jnp.asarray(conv_p["w_msg"], _F32),
                           jnp.asarray(conv_p["w_edge"], _F32)], axis=0)
    (w1, b1), (w2, b2) = mlp_p
    w2 = jnp.asarray(w2, _F32)
    b2 = jnp.asarray(b2, _F32)

    b2row = jnp.zeros((LANES,), _F32).at[:HIDDEN].set(b2)
    if scorer is not None:
        # Exact fold: score_logit = (h@W2 + b2)@lw + lb = h@(W2@lw) + (b2@lw + lb)
        lw = jnp.asarray(scorer[0], _F32).reshape(HIDDEN, 1)
        lb = jnp.asarray(scorer[1], _F32).reshape(-1)[0]
        w2x = jnp.concatenate([w2, w2 @ lw], axis=1)
        b2row = b2row.at[HIDDEN].set((b2 @ lw)[0] + lb)
    else:
        w2x = w2

    wslab = jnp.concatenate([_padc(ws, _C_WS1 - _C_WS0),
                             _padc(wme, _C_WM1 - _C_WM0),
                             _padc(w1, _C_W11 - _C_W10),
                             _padc(w2x, _C_W21 - _C_W20)], axis=0).astype(_BF16)
    bslab = jnp.zeros((8, LANES), _F32)
    bslab = bslab.at[0, :HIDDEN].set(jnp.asarray(conv_p["b"], _F32))
    bslab = bslab.at[1, :HIDDEN].set(jnp.asarray(b1, _F32))
    bslab = bslab.at[2].set(b2row)
    return {"w": wslab, "b": bslab}


def _pack_aggr(aggr_p, pre=None):
    gc = aggr_p["gc"]
    ws = jnp.asarray(gc["w_self"], _F32)
    wm = jnp.asarray(gc["w_msg"], _F32)
    bgc = jnp.asarray(gc["b"], _F32)
    emb = jnp.asarray(aggr_p["emb"], _F32).reshape(1, -1)
    (w1, b1), (w2, b2) = aggr_p["mlp"]

    if pre is not None:      # fold ScoreAggr linear into the message path (exact)
        wpre = jnp.asarray(pre[0], _F32)
        bpre = jnp.asarray(pre[1], _F32)
        wm_eff = wpre @ wm
        bmsg = bpre @ wm
    else:
        wm_eff = wm
        bmsg = jnp.zeros((HIDDEN,), _F32)

    wslab = jnp.concatenate([_padc(wm_eff, _A_WM1 - _A_WM0),
                             _padc(w1, _A_W11 - _A_W10),
                             _padc(w2, _A_W21 - _A_W20)], axis=0).astype(_BF16)
    selfbias = (emb @ ws).reshape(-1) + bgc       # hoisted emb@Ws + b
    bslab = jnp.zeros((8, LANES), _F32)
    bslab = bslab.at[0, :HIDDEN].set(bmsg)
    bslab = bslab.at[1, :HIDDEN].set(selfbias)
    bslab = bslab.at[2, :HIDDEN].set(jnp.asarray(b1, _F32))
    bslab = bslab.at[3, :HIDDEN].set(jnp.asarray(b2, _F32))
    return {"w": wslab, "b": bslab}


def prepare_params(raw):
    L = L_LAYERS
    prep = {"edge_embedder": _pack_mlp2(raw["edge_embedder"]),
            "down": [], "up": [], "node_aggr": [], "edge_aggr": [],
            "pool_k": list(raw["pool_k"])}
    for i in range(L + 1):
        scorer = None
        if i < L:
            p = raw["pools"][i]
            scorer = (p["lin_w"], p["lin_b"])
        prep["down"].append(_pack_conv_mlp(raw["down_convs"][i],
                                           raw["down_mlps"][i], scorer))
        prep["up"].append(_pack_conv_mlp(raw["up_convs"][i],
                                         raw["up_mlps"][i], None))
    for i in range(L):
        p = raw["pools"][i]
        prep["node_aggr"].append(_pack_aggr(p["x_aggr"],
                                            pre=(p["score_aggr_w"], p["score_aggr_b"])))
        prep["edge_aggr"].append(_pack_aggr(p["edge_aggr"], pre=None))
    return prep


# ----------------------------------------------------------------------------
# Graph-algorithmic glue (host numpy) — data-dependent sizes, exact port
# ----------------------------------------------------------------------------
def maximal_independent_set(edge_index, n, k=1, perm=None):
    row = np.asarray(edge_index[0], np.int64)
    col = np.asarray(edge_index[1], np.int64)
    if perm is None:
        rank = np.arange(n, dtype=np.int64)
    else:
        rank = np.zeros(n, dtype=np.int64)
        rank[np.asarray(perm, np.int64)] = np.arange(n, dtype=np.int64)
    mis = np.zeros(n, dtype=bool)
    mask = mis.copy()
    min_rank = rank.copy()
    while not mask.all():
        for _ in range(k):
            min_neigh = np.full_like(min_rank, n)
            np.minimum.at(min_neigh, col, min_rank[row])
            min_rank = np.minimum(min_neigh, min_rank)
        mis = mis | (rank == min_rank)
        mask_u8 = mis.astype(np.uint8)
        for _ in range(k):
            max_neigh = np.zeros_like(mask_u8)
            np.maximum.at(max_neigh, col, mask_u8[row])
            mask_u8 = np.maximum(max_neigh, mask_u8)
        mask = mask_u8.astype(bool)
        min_rank = rank.copy()
        min_rank[mask] = n
    return mis


def maximal_independent_set_cluster(edge_index, n, k=1, perm=None):
    mis = maximal_independent_set(edge_index, n, k, perm)
    row = np.asarray(edge_index[0], np.int64)
    col = np.asarray(edge_index[1], np.int64)
    if perm is None:
        rank = np.arange(n, dtype=np.int64)
    else:
        rank = np.zeros(n, dtype=np.int64)
        rank[np.asarray(perm, np.int64)] = np.arange(n, dtype=np.int64)
    min_rank = np.full(n, n, dtype=np.int64)
    rank_mis = rank[mis]
    min_rank[mis] = rank_mis
    for _ in range(k):
        min_neigh = np.full_like(min_rank, n)
        np.minimum.at(min_neigh, col, min_rank[row])
        min_rank = np.minimum(min_neigh, min_rank)
    _, clusters = np.unique(min_rank, return_inverse=True)
    clusters = clusters.reshape(-1)
    perm_local = np.argsort(rank_mis)
    return mis, perm_local[clusters]


# ----------------------------------------------------------------------------
# GnnHier forward
# ----------------------------------------------------------------------------
def gnn_hier_forward(prep, edge_index, edge_raw, features):
    L = L_LAYERS
    row0 = np.asarray(edge_index[0], np.int64)
    col0 = np.asarray(edge_index[1], np.int64)
    src0 = jnp.asarray(row0.astype(np.int32))
    dst0_row = jnp.asarray(col0.astype(np.int32).reshape(1, -1))

    # edge embedder + down level 0 (+ fused scorer of pools[0])
    x, score, ef = _seg_embed_conv0(jnp.asarray(edge_raw, _F32),
                                    jnp.asarray(features, _F32),
                                    src0, dst0_row,
                                    prep["edge_embedder"], prep["down"][0])

    xs = [x]
    srcs, dst_rows, efs = [src0], [dst0_row], [ef]
    rows, cols = [row0], [col0]
    perms = []

    for i in range(1, L + 1):
        k = prep["pool_k"][i - 1]
        n = int(x.shape[0])
        row, col = rows[-1], cols[-1]

        # ---- host: k-MIS coarsening (data-dependent; single score sync) ----
        score_np = np.asarray(score).reshape(-1).astype(np.float32)
        k_sums = np.ones(n, dtype=np.float32)            # 'greedy' heuristic
        for _ in range(k):
            vals = k_sums[row].copy()
            np.add.at(k_sums, col, vals)
        updated = score_np / k_sums
        perm = np.argsort(-updated)
        mis, cluster = maximal_independent_set_cluster((row, col), n, k, perm)
        c = int(mis.sum())
        crow, ccol = cluster[row], cluster[col]
        u, uinv = np.unique(crow * c + ccol, return_inverse=True)
        uinv = uinv.reshape(-1)
        nu = int(u.shape[0])
        new_row = (u // c).astype(np.int64)
        new_col = (u % c).astype(np.int64)

        cluster_row = jnp.asarray(cluster.astype(np.int32).reshape(1, -1))
        uinv_row = jnp.asarray(uinv.astype(np.int32).reshape(1, -1))
        src_new = jnp.asarray(new_row.astype(np.int32))
        dst_new_row = jnp.asarray(new_col.astype(np.int32).reshape(1, -1))

        with_score = i < L
        x, score, ef = _seg_pool_level(
            x, score, ef, cluster_row, uinv_row, src_new, dst_new_row,
            prep["edge_aggr"][i - 1], prep["node_aggr"][i - 1], prep["down"][i],
            c=c, nu=nu, with_score=with_score)

        if i < L:
            xs.append(x)
        rows.append(new_row); cols.append(new_col)
        srcs.append(src_new); dst_rows.append(dst_new_row); efs.append(ef)
        perms.append(perm[mis])

    # up path (sum_res residual + conv), then final conv on the original graph
    for i in range(L):
        j = L - 1 - i
        perm_j = jnp.asarray(np.asarray(perms[j], np.int64).astype(np.int32))
        x = _seg_up(x, xs[j], perm_j, srcs[j], dst_rows[j], efs[j], prep["up"][i])

    x = _seg_conv(x, srcs[0], dst_rows[0], efs[0], prep["up"][L])
    return x


# ----------------------------------------------------------------------------
# Deterministic parameter initialization (raw, then packed)
# ----------------------------------------------------------------------------
_KEY = [jax.random.PRNGKey(0)]
def _nk():
    _KEY[0], sub = jax.random.split(_KEY[0])
    return sub

def init_linear(fin, fout):
    w = 0.1 * jax.random.normal(_nk(), (fin, fout), _F32)
    b = 0.1 * jax.random.normal(_nk(), (fout,), _F32)
    return w, b

def init_mlp(nl, fin, fhid, fout):
    dims = [fin] + [fhid] * (nl - 1) + [fout]
    return [init_linear(dims[i], dims[i + 1]) for i in range(nl)]

def init_gconv(fin, fout, edge_dim):
    return {
        "w_self": 0.1 * jax.random.normal(_nk(), (fin, fout), _F32),
        "w_msg": 0.1 * jax.random.normal(_nk(), (fin, fout), _F32),
        "w_edge": 0.1 * jax.random.normal(_nk(), (edge_dim, fout), _F32),
        "b": 0.1 * jax.random.normal(_nk(), (fout,), _F32),
    }

def init_aggr(hidden, nmlp):
    return {
        "emb": 0.1 * jax.random.normal(_nk(), (hidden,), _F32),
        "mlp": init_mlp(nmlp, hidden, hidden, hidden),
        "gc": init_gconv(hidden, hidden, hidden),
    }

def init_pool(hidden, nmlp):
    lw, lb = init_linear(hidden, 1)
    sw, sb = init_linear(hidden + 1, hidden)
    return {
        "lin_w": lw, "lin_b": lb,
        "score_aggr_w": sw, "score_aggr_b": sb,
        "x_aggr": init_aggr(hidden, nmlp),
        "edge_aggr": init_aggr(hidden, nmlp),
    }

def init_gnn_hier():
    L, H, nmlp = L_LAYERS, HIDDEN, N_MLP
    return {
        "edge_embedder": init_mlp(nmlp, EDGE_RAW_DIM, H, H),
        "pools": [init_pool(H, nmlp) for _ in range(L)],
        "pool_k": [1 if i < L - 1 else 2 for i in range(L)],
        "down_convs": [init_gconv(H, H, H) for _ in range(L + 1)],
        "down_mlps": [init_mlp(nmlp, H, H, H) for _ in range(L + 1)],
        "up_convs": [init_gconv(H, H, H) for _ in range(L + 1)],
        "up_mlps": [init_mlp(nmlp, H, H, H) for _ in range(L + 1)],
    }


# ----------------------------------------------------------------------------
# Main
# ----------------------------------------------------------------------------
if __name__ == "__main__":
    raw_params = init_gnn_hier()
    prep = prepare_params(raw_params)

    # Small undirected graph: 16 nodes, ring + chords, both edge directions.
    N = 16
    src_list, dst_list = [], []
    for i in range(N):
        for d in (1, 5):
            j = (i + d) % N
            src_list += [i, j]
            dst_list += [j, i]
    edge_index = (np.asarray(src_list, np.int64), np.asarray(dst_list, np.int64))
    E = edge_index[0].shape[0]  # 64

    key = jax.random.PRNGKey(0)
    k_feat, k_edge = jax.random.split(key)
    features = jax.random.normal(k_feat, (N, HIDDEN), _F32)
    edge_raw = jax.random.normal(k_edge, (E, EDGE_RAW_DIM), _F32)

    out = gnn_hier_forward(prep, edge_index, edge_raw, features)
    out = jax.block_until_ready(out)
    assert out.shape == (N, HIDDEN), out.shape
    assert bool(jnp.all(jnp.isfinite(out)))
    print("KERNEL_OK")
</pallas_src>

<mosaic_0001>
module attributes {stable_mosaic.version = 11 : i64} {
  func.func @_mlp2_kernel(%arg0: i32, %arg1: memref<64x16xf32, #tpu.memory_space<vmem>>, %arg2: memref<144x128xbf16, #tpu.memory_space<vmem>>, %arg3: memref<8x128xf32, #tpu.memory_space<vmem>>, %arg4: memref<64x128xf32, #tpu.memory_space<vmem>>) attributes {dimension_semantics = [#tpu.dimension_semantics<arbitrary>], iteration_bounds = array<i64: 1>, scalar_prefetch = 0 : i64, scratch_operands = 0 : i64, tpu.core_type = #tpu.core_type<tc>, window_params = [{pipeline_mode = #tpu.pipeline_mode<synchronous>, transform_indices = @transform_0, window_bounds = array<i64: 64, 16>}, {pipeline_mode = #tpu.pipeline_mode<synchronous>, transform_indices = @transform_1, window_bounds = array<i64: 144, 128>}, {pipeline_mode = #tpu.pipeline_mode<synchronous>, transform_indices = @transform_2, window_bounds = array<i64: 8, 128>}, {pipeline_mode = #tpu.pipeline_mode<synchronous>, transform_indices = @transform_3, window_bounds = array<i64: 64, 128>}]} {
    %c0 = arith.constant 0 : index
    %c0_0 = arith.constant 0 : index
    %0 = vector.load %arg3[%c0, %c0_0] : memref<8x128xf32, #tpu.memory_space<vmem>>, vector<8x128xf32>
    %c0_1 = arith.constant 0 : index
    %c0_2 = arith.constant 0 : index
    %1 = vector.load %arg1[%c0_1, %c0_2] : memref<64x16xf32, #tpu.memory_space<vmem>>, vector<64x16xf32>
    %2 = arith.truncf %1 : vector<64x16xf32> to vector<64x16xbf16>
    %c0_3 = arith.constant 0 : index
    %c0_4 = arith.constant 0 : index
    %3 = vector.load %arg2[%c0_3, %c0_4] : memref<144x128xbf16, #tpu.memory_space<vmem>>, vector<16x128xbf16>
    %cst = arith.constant dense<0.000000e+00> : vector<64x128xf32>
    %4 = tpu.matmul %2, %3, %cst {dimension_numbers = #tpu.dot_dimension_numbers<[1], [0], [0], [1], [0, 0, 1, 1], [], []>} : vector<64x16xbf16>, vector<16x128xbf16>, vector<64x128xf32> -> vector<64x128xf32>
    %5 = vector.extract_strided_slice %0 {offsets = [0, 0], sizes = [1, 128], strides = [1, 1]} : vector<8x128xf32> to vector<1x128xf32>
    %6 = vector.broadcast %5 : vector<1x128xf32> to vector<64x128xf32>
    %7 = arith.addf %4, %6 : vector<64x128xf32>
    %8 = arith.mulf %7, %7 : vector<64x128xf32>
    %9 = arith.mulf %7, %8 : vector<64x128xf32>
    %cst_5 = arith.constant 4.471500e-02 : f32
    %10 = vector.broadcast %cst_5 : f32 to vector<64x128xf32>
    %11 = arith.mulf %10, %9 : vector<64x128xf32>
    %12 = arith.addf %7, %11 : vector<64x128xf32>
    %cst_6 = arith.constant 0.797884583 : f32
    %13 = vector.broadcast %cst_6 : f32 to vector<64x128xf32>
    %14 = arith.mulf %13, %12 : vector<64x128xf32>
    %15 = math.tanh %14 : vector<64x128xf32>
    %cst_7 = arith.constant 1.000000e+00 : f32
    %16 = vector.broadcast %cst_7 : f32 to vector<64x128xf32>
    %17 = arith.addf %16, %15 : vector<64x128xf32>
    %cst_8 = arith.constant 5.000000e-01 : f32
    %18 = vector.broadcast %cst_8 : f32 to vector<64x128xf32>
    %19 = arith.mulf %18, %17 : vector<64x128xf32>
    %20 = arith.mulf %7, %19 : vector<64x128xf32>
    %21 = arith.truncf %20 : vector<64x128xf32> to vector<64x128xbf16>
    %c16 = arith.constant 16 : index
    %c0_9 = arith.constant 0 : index
    %22 = vector.load %arg2[%c16, %c0_9] : memref<144x128xbf16, #tpu.memory_space<vmem>>, vector<128x128xbf16>
    %cst_10 = arith.constant dense<0.000000e+00> : vector<64x128xf32>
    %23 = tpu.matmul %21, %22, %cst_10 {dimension_numbers = #tpu.dot_dimension_numbers<[1], [0], [0], [1], [0, 0, 1, 1], [], []>} : vector<64x128xbf16>, vector<128x128xbf16>, vector<64x128xf32> -> vector<64x128xf32>
    %24 = vector.extract_strided_slice %0 {offsets = [1, 0], sizes = [1, 128], strides = [1, 1]} : vector<8x128xf32> to vector<1x128xf32>
    %25 = vector.broadcast %24 : vector<1x128xf32> to vector<64x128xf32>
    %26 = arith.addf %23, %25 : vector<64x128xf32>
    %c0_11 = arith.constant 0 : index
    %c0_12 = arith.constant 0 : index
    %27 = vector.load %arg4[%c0_11, %c0_12] : memref<64x128xf32, #tpu.memory_space<vmem>>, vector<64x128xf32>
    tpu.vector_store %arg4[%c0_11, %c0_12], %26 {strides = array<i32>} : memref<64x128xf32, #tpu.memory_space<vmem>>, vector<64x128xf32>,
    return
  }
  func.func @transform_0(%arg0: i32) -> (i32, i32) {
    %c0_i32 = arith.constant 0 : i32
    %c0_i32_0 = arith.constant 0 : i32
    %c0_i32_1 = arith.constant 0 : i32
    return %c0_i32, %c0_i32_0 : i32, i32
  }
  func.func @transform_1(%arg0: i32) -> (i32, i32) {
    %c0_i32 = arith.constant 0 : i32
    %c0_i32_0 = arith.constant 0 : i32
    %c0_i32_1 = arith.constant 0 : i32
    return %c0_i32, %c0_i32_0 : i32, i32
  }
  func.func @transform_2(%arg0: i32) -> (i32, i32) {
    %c0_i32 = arith.constant 0 : i32
    %c0_i32_0 = arith.constant 0 : i32
    %c0_i32_1 = arith.constant 0 : i32
    return %c0_i32, %c0_i32_0 : i32, i32
  }
  func.func @transform_3(%arg0: i32) -> (i32, i32) {
    %c0_i32 = arith.constant 0 : i32
    %c0_i32_0 = arith.constant 0 : i32
    %c0_i32_1 = arith.constant 0 : i32
    return %c0_i32, %c0_i32_0 : i32, i32
  }
}

module attributes {stable_mosaic.version = 11 : i64} {
  func.func @_conv_mlp_kernel(%arg0: i32, %arg1: memref<16x32xf32, #tpu.memory_space<vmem>>, %arg2: memref<64x64xf32, #tpu.memory_space<vmem>>, %arg3: memref<1x64xi32, #tpu.memory_space<vmem>>, %arg4: memref<352x128xbf16, #tpu.memory_space<vmem>>, %arg5: memref<8x128xf32, #tpu.memory_space<vmem>>, %arg6: memref<16x128xf32, #tpu.memory_space<vmem>>) attributes {dimension_semantics = [#tpu.dimension_semantics<arbitrary>], iteration_bounds = array<i64: 1>, scalar_prefetch = 0 : i64, scratch_operands = 0 : i64, tpu.core_type = #tpu.core_type<tc>, window_params = [{pipeline_mode = #tpu.pipeline_mode<synchronous>, transform_indices = @transform_0, window_bounds = array<i64: 16, 32>}, {pipeline_mode = #tpu.pipeline_mode<synchronous>, transform_indices = @transform_1, window_bounds = array<i64: 64, 64>}, {pipeline_mode = #tpu.pipeline_mode<synchronous>, transform_indices = @transform_2, window_bounds = array<i64: 1, 64>}, {pipeline_mode = #tpu.pipeline_mode<synchronous>, transform_indices = @transform_3, window_bounds = array<i64: 352, 128>}, {pipeline_mode = #tpu.pipeline_mode<synchronous>, transform_indices = @transform_4, window_bounds = array<i64: 8, 128>}, {pipeline_mode = #tpu.pipeline_mode<synchronous>, transform_indices = @transform_5, window_bounds = array<i64: 16, 128>}]} {
    %c0 = arith.constant 0 : index
    %c0_0 = arith.constant 0 : index
    %0 = vector.load %arg5[%c0, %c0_0] : memref<8x128xf32, #tpu.memory_space<vmem>>, vector<8x128xf32>
    %c0_1 = arith.constant 0 : index
    %c0_2 = arith.constant 0 : index
    %1 = vector.load %arg2[%c0_1, %c0_2] : memref<64x64xf32, #tpu.memory_space<vmem>>, vector<64x64xf32>
    %2 = arith.truncf %1 : vector<64x64xf32> to vector<64x64xbf16>
    %c32 = arith.constant 32 : index
    %c0_3 = arith.constant 0 : index
    %3 = vector.load %arg4[%c32, %c0_3] : memref<352x128xbf16, #tpu.memory_space<vmem>>, vector<64x128xbf16>
    %cst = arith.constant dense<0.000000e+00> : vector<64x128xf32>
    %4 = tpu.matmul %2, %3, %cst {dimension_numbers = #tpu.dot_dimension_numbers<[1], [0], [0], [1], [0, 0, 1, 1], [], []>} : vector<64x64xbf16>, vector<64x128xbf16>, vector<64x128xf32> -> vector<64x128xf32>
    %5 = tpu.iota {dimensions = array<i32: 0>} : vector<16x64xi32>
    %c0_4 = arith.constant 0 : index
    %c0_5 = arith.constant 0 : index
    %6 = vector.load %arg3[%c0_4, %c0_5] : memref<1x64xi32, #tpu.memory_space<vmem>>, vector<1x64xi32>
    %7 = vector.broadcast %6 : vector<1x64xi32> to vector<16x64xi32>
    %8 = arith.cmpi eq, %5, %7 : vector<16x64xi32>
    %9 = arith.extui %8 : vector<16x64xi1> to vector<16x64xi32>
    %10 = arith.sitofp %9 : vector<16x64xi32> to vector<16x64xf32>
    %11 = arith.truncf %10 : vector<16x64xf32> to vector<16x64xbf16>
    %12 = arith.truncf %4 : vector<64x128xf32> to vector<64x128xbf16>
    %cst_6 = arith.constant dense<0.000000e+00> : vector<16x128xf32>
    %13 = tpu.matmul %11, %12, %cst_6 {dimension_numbers = #tpu.dot_dimension_numbers<[1], [0], [0], [1], [0, 0, 1, 1], [], []>} : vector<16x64xbf16>, vector<64x128xbf16>, vector<16x128xf32> -> vector<16x128xf32>
    %c0_7 = arith.constant 0 : index
    %c0_8 = arith.constant 0 : index
    %14 = vector.load %arg1[%c0_7, %c0_8] : memref<16x32xf32, #tpu.memory_space<vmem>>, vector<16x32xf32>
    %15 = arith.truncf %14 : vector<16x32xf32> to vector<16x32xbf16>
    %c0_9 = arith.constant 0 : index
    %c0_10 = arith.constant 0 : index
    %16 = vector.load %arg4[%c0_9, %c0_10] : memref<352x128xbf16, #tpu.memory_space<vmem>>, vector<32x128xbf16>
    %cst_11 = arith.constant dense<0.000000e+00> : vector<16x128xf32>
    %17 = tpu.matmul %15, %16, %cst_11 {dimension_numbers = #tpu.dot_dimension_numbers<[1], [0], [0], [1], [0, 0, 1, 1], [], []>} : vector<16x32xbf16>, vector<32x128xbf16>, vector<16x128xf32> -> vector<16x128xf32>
    %18 = arith.addf %17, %13 : vector<16x128xf32>
    %19 = vector.extract_strided_slice %0 {offsets = [0, 0], sizes = [1, 128], strides = [1, 1]} : vector<8x128xf32> to vector<1x128xf32>
    %20 = vector.broadcast %19 : vector<1x128xf32> to vector<16x128xf32>
    %21 = arith.addf %18, %20 : vector<16x128xf32>
    %22 = arith.truncf %21 : vector<16x128xf32> to vector<16x128xbf16>
    %c96 = arith.constant 96 : index
    %c0_12 = arith.constant 0 : index
    %23 = vector.load %arg4[%c96, %c0_12] : memref<352x128xbf16, #tpu.memory_space<vmem>>, vector<128x128xbf16>
    %cst_13 = arith.constant dense<0.000000e+00> : vector<16x128xf32>
    %24 = tpu.matmul %22, %23, %cst_13 {dimension_numbers = #tpu.dot_dimension_numbers<[1], [0], [0], [1], [0, 0, 1, 1], [], []>} : vector<16x128xbf16>, vector<128x128xbf16>, vector<16x128xf32> -> vector<16x128xf32>
    %25 = vector.extract_strided_slice %0 {offsets = [1, 0], sizes = [1, 128], strides = [1, 1]} : vector<8x128xf32> to vector<1x128xf32>
    %26 = vector.broadcast %25 : vector<1x128xf32> to vector<16x128xf32>
    %27 = arith.addf %24, %26 : vector<16x128xf32>
    %28 = arith.mulf %27, %27 : vector<16x128xf32>
    %29 = arith.mulf %27, %28 : vector<16x128xf32>
    %cst_14 = arith.constant 4.471500e-02 : f32
    %30 = vector.broadcast %cst_14 : f32 to vector<16x128xf32>
    %31 = arith.mulf %30, %29 : vector<16x128xf32>
    %32 = arith.addf %27, %31 : vector<16x128xf32>
    %cst_15 = arith.constant 0.797884583 : f32
    %33 = vector.broadcast %cst_15 : f32 to vector<16x128xf32>
    %34 = arith.mulf %33, %32 : vector<16x128xf32>
    %35 = math.tanh %34 : vector<16x128xf32>
    %cst_16 = arith.constant 1.000000e+00 : f32
    %36 = vector.broadcast %cst_16 : f32 to vector<16x128xf32>
    %37 = arith.addf %36, %35 : vector<16x128xf32>
    %cst_17 = arith.constant 5.000000e-01 : f32
    %38 = vector.broadcast %cst_17 : f32 to vector<16x128xf32>
    %39 = arith.mulf %38, %37 : vector<16x128xf32>
    %40 = arith.mulf %27, %39 : vector<16x128xf32>
    %41 = arith.truncf %40 : vector<16x128xf32> to vector<16x128xbf16>
    %c224 = arith.constant 224 : index
    %c0_18 = arith.constant 0 : index
    %42 = vector.load %arg4[%c224, %c0_18] : memref<352x128xbf16, #tpu.memory_space<vmem>>, vector<128x128xbf16>
    %cst_19 = arith.constant dense<0.000000e+00> : vector<16x128xf32>
    %43 = tpu.matmul %41, %42, %cst_19 {dimension_numbers = #tpu.dot_dimension_numbers<[1], [0], [0], [1], [0, 0, 1, 1], [], []>} : vector<16x128xbf16>, vector<128x128xbf16>, vector<16x128xf32> -> vector<16x128xf32>
    %44 = vector.extract_strided_slice %0 {offsets = [2, 0], sizes = [1, 128], strides = [1, 1]} : vector<8x128xf32> to vector<1x128xf32>
    %45 = vector.broadcast %44 : vector<1x128xf32> to vector<16x128xf32>
    %46 = arith.addf %43, %45 : vector<16x128xf32>
    %c0_20 = arith.constant 0 : index
    %c0_21 = arith.constant 0 : index
    %47 = vector.load %arg6[%c0_20, %c0_21] : memref<16x128xf32, #tpu.memory_space<vmem>>, vector<16x128xf32>
    tpu.vector_store %arg6[%c0_20, %c0_21], %46 {strides = array<i32>} : memref<16x128xf32, #tpu.memory_space<vmem>>, vector<16x128xf32>,
    return
  }
  func.func @transform_0(%arg0: i32) -> (i32, i32) {
    %c0_i32 = arith.constant 0 : i32
    %c0_i32_0 = arith.constant 0 : i32
    %c0_i32_1 = arith.constant 0 : i32
    return %c0_i32, %c0_i32_0 : i32, i32
  }
  func.func @transform_1(%arg0: i32) -> (i32, i32) {
    %c0_i32 = arith.constant 0 : i32
    %c0_i32_0 = arith.constant 0 : i32
    %c0_i32_1 = arith.constant 0 : i32
    return %c0_i32, %c0_i32_0 : i32, i32
  }
  func.func @transform_2(%arg0: i32) -> (i32, i32) {
    %c0_i32 = arith.constant 0 : i32
    %c0_i32_0 = arith.constant 0 : i32
    %c0_i32_1 = arith.constant 0 : i32
    return %c0_i32, %c0_i32_0 : i32, i32
  }
  func.func @transform_3(%arg0: i32) -> (i32, i32) {
    %c0_i32 = arith.constant 0 : i32
    %c0_i32_0 = arith.constant 0 : i32
    %c0_i32_1 = arith.constant 0 : i32
    return %c0_i32, %c0_i32_0 : i32, i32
  }
  func.func @transform_4(%arg0: i32) -> (i32, i32) {
    %c0_i32 = arith.constant 0 : i32
    %c0_i32_0 = arith.constant 0 : i32
    %c0_i32_1 = arith.constant 0 : i32
    return %c0_i32, %c0_i32_0 : i32, i32
  }
  func.func @transform_5(%arg0: i32) -> (i32, i32) {
    %c0_i32 = arith.constant 0 : i32
    %c0_i32_0 = arith.constant 0 : i32
    %c0_i32_1 = arith.constant 0 : i32
    return %c0_i32, %c0_i32_0 : i32, i32
  }
}

</mosaic_0001>

<llo_original>
// kernel: _seg_embed_conv0.2
$region0: #{_seg_embed_conv0.2}
  #allocation0 [shape = 'u32[]', space=smem, size = 0x4, offset = 0x4, fixed_abs, tag = 'smem constant byte address 0x4 - core index']
  #allocation1 [shape = 'u32[144,128]{1,0:T(1,128)}', space=vmem, size = 0x12000, scoped, tag = 'internal scratch']
  %s0 = inlined_call_operand.vmem [shape: f32[64,16], index: 0, kind: input, shape index: {}]
  %s1 = inlined_call_operand.vmem [shape: bf16[144,128], index: 1, kind: input, shape index: {}]
  %s2 = inlined_call_operand.vmem [shape: f32[8,128], index: 2, kind: input, shape index: {}]
  %s3 = inlined_call_operand.vmem [shape: f32[64,128], index: 3, kind: output, shape index: {}]
  %s4 = sld [smem:[#allocation0]]
  $region22: #{_seg_embed_conv0.2} parent=0
    _
  %s6 = ssub.s32 1, %s4
  %s7 = scalar_select 0, %s6, %s4
  // Predicated region
  $region2: #{_seg_embed_conv0.2} parent=0 // pred_check
    _
  $region3: #{_seg_embed_conv0.2} parent=0 // pred_check_branch
    %9 = sbr.rel (0) target = $region5
  $region4: #{_seg_embed_conv0.2} parent=0 // pred_region
    _
  $region5: #{_seg_embed_conv0.2} parent=0 // pred_fallthru
    _
  // Predicated region
  $region6: #{_seg_embed_conv0.2} parent=0 // pred_check
    _
  $region7: #{_seg_embed_conv0.2} parent=0 // pred_check_branch
    %11 = sbr.rel (0) target = $region9
  $region8: #{_seg_embed_conv0.2} parent=0 // pred_region
    _
  $region9: #{_seg_embed_conv0.2} parent=0 // pred_fallthru
    _
  // Predicated region
  $region10: #{_seg_embed_conv0.2} parent=0 // pred_check
    _
  $region11: #{_seg_embed_conv0.2} parent=0 // pred_check_branch
    %13 = sbr.rel (0) target = $region13
  $region12: #{_seg_embed_conv0.2} parent=0 // pred_region
    _
  $region13: #{_seg_embed_conv0.2} parent=0 // pred_fallthru
    _
  %v15 = vld [vmem:[%s2] sm:$0xff]
  %v16 = vld [vmem:[%s0] sm:$0xff]
  %v17 = vld [vmem:[%s0 + $0x8] sm:$0xff]
  %v18 = vld [vmem:[%s0 + $0x10] sm:$0xff]
  %v19 = vld [vmem:[%s0 + $0x18] sm:$0xff]
  %v20 = vld [vmem:[%s0 + $0x20] sm:$0xff]
  %v21 = vld [vmem:[%s0 + $0x28] sm:$0xff]
  %v22 = vld [vmem:[%s0 + $0x30] sm:$0xff]
  %v23 = vld [vmem:[%s0 + $0x38] sm:$0xff]
  %v24 = vpack.c.bf16 %v17, %v16
  %v25 = vpack.c.bf16 %v19, %v18
  %v26 = vpack.c.bf16 %v21, %v20
  %v27 = vpack.c.bf16 %v23, %v22
  %v28 = vld [vmem:[%s1] sm:$0xf]
  %v29 = vld [vmem:[%s1 + $0x4] sm:$0xf]
  %v30 = vlaneseq
  %v31 = vshrl.u32 %v30, 7
  %v32 = vsub.s32 0, %v31
  %v33 = vrot.slane %v15, %v32
  %v36 = vunpack.c.l.b16 %v28
  %v37 = vunpack.c.l.b16 %v29
  %v38 = vpack.c.b16 %v37, %v36
  %vm40 = vcmask 130048
  %v42 = vsel %vm40, %v24, 0
  %v45 = vsel %vm40, %v25, 0
  %v48 = vsel %vm40, %v26, 0
  %v51 = vsel %vm40, %v27, 0
  %53 = vmatprep.subr.bf16.mxu0 0
  %54 = vmatpush1.bf16.msra.mxu0 %v38
  %55 = vmatprep.subr.bf16.mxu0 0
  %56 = vmatpush1.bf16.msra.mxu0 0
  %57 = vmatprep.subr.bf16.mxu0 0
  %58 = vmatpush1.bf16.msra.mxu0 0
  %59 = vmatprep.subr.bf16.mxu0 0
  %60 = vmatpush1.bf16.msra.mxu0 0
  %61 = vmatprep.subr.bf16.mxu0 0
  %62 = vmatpush1.bf16.msra.mxu0 0
  %63 = vmatprep.subr.bf16.mxu0 0
  %64 = vmatpush1.bf16.msra.mxu0 0
  %65 = vmatprep.subr.bf16.mxu0 0
  %66 = vmatpush1.bf16.msra.mxu0 0
  %67 = vmatprep.subr.bf16.mxu0 0
  %68 = vmatpush1.bf16.msra.mxu0 0
  %69 = vmatprep.subr.bf16.mxu0 0
  %70 = vmatpush1.bf16.msra.mxu0 0
  %71 = vmatprep.subr.bf16.mxu0 0
  %72 = vmatpush1.bf16.msra.mxu0 0
  %73 = vmatprep.subr.bf16.mxu0 0
  %74 = vmatpush1.bf16.msra.mxu0 0
  %75 = vmatprep.subr.bf16.mxu0 0
  %76 = vmatpush1.bf16.msra.mxu0 0
  %77 = vmatprep.subr.bf16.mxu0 0
  %78 = vmatpush1.bf16.msra.mxu0 0
  %79 = vmatprep.subr.bf16.mxu0 0
  %80 = vmatpush1.bf16.msra.mxu0 0
  %81 = vmatprep.subr.bf16.mxu0 0
  %82 = vmatpush1.bf16.msra.mxu0 0
  %83 = vmatprep.subr.bf16.mxu0 0
  %84 = vmatpush1.bf16.msra.mxu0 0
  %85 = vmatprep.mubr.bf16.mxu0 0
  %86 = vmatmul.mubr.bf16.gmra.mrb[0].mxu0 %v42
  %v87 = vpop.f32.mrb[0].mxu0
  %v88 = vadd.f32 %v33, %v87
  %v89 = vpop.f32.mrb[0].mxu0
  %v90 = vpop.f32.mrb[0].mxu0
  %v91 = vadd.f32 %v33, %v90
  %v92 = vpop.f32.mrb[0].mxu0
  %93 = vmatprep.mubr.bf16.mxu0 0
  %94 = vmatmul.mubr.bf16.gmra.mrb[0].mxu0 %v45
  %v95 = vpop.f32.mrb[0].mxu0
  %v96 = vadd.f32 %v33, %v95
  %v97 = vpop.f32.mrb[0].mxu0
  %v98 = vpop.f32.mrb[0].mxu0
  %v99 = vadd.f32 %v33, %v98
  %v100 = vpop.f32.mrb[0].mxu0
  %101 = vmatprep.mubr.bf16.mxu0 0
  %102 = vmatmul.mubr.bf16.gmra.mrb[0].mxu0 %v48
  %v103 = vpop.f32.mrb[0].mxu0
  %v104 = vadd.f32 %v33, %v103
  %v105 = vpop.f32.mrb[0].mxu0
  %v106 = vpop.f32.mrb[0].mxu0
  %v107 = vadd.f32 %v33, %v106
  %v108 = vpop.f32.mrb[0].mxu0
  %109 = vmatprep.mubr.bf16.mxu0 0
  %110 = vmatmul.mubr.bf16.gmra.mrb[0].mxu0 %v51
  %v111 = vpop.f32.mrb[0].mxu0
  %v112 = vadd.f32 %v33, %v111
  %v113 = vpop.f32.mrb[0].mxu0
  %v114 = vpop.f32.mrb[0].mxu0
  %v115 = vadd.f32 %v33, %v114
  %v116 = vpop.f32.mrb[0].mxu0
  %117 = vdwg.mxu0
  %v118 = vmul.f32 %v88, %v88
  %v119 = vmul.f32 %v91, %v91
  %v120 = vmul.f32 %v96, %v96
  %v121 = vmul.f32 %v99, %v99
  %v122 = vmul.f32 %v104, %v104
  %v123 = vmul.f32 %v107, %v107
  %v124 = vmul.f32 %v112, %v112
  %v125 = vmul.f32 %v115, %v115
  %v126 = vmul.f32 %v88, %v118
  %v127 = vmul.f32 %v91, %v119
  %v128 = vmul.f32 %v96, %v120
  %v129 = vmul.f32 %v99, %v121
  %v130 = vmul.f32 %v104, %v122
  %v131 = vmul.f32 %v107, %v123
  %v132 = vmul.f32 %v112, %v124
  %v133 = vmul.f32 %v115, %v125
  %v134 = vmul.f32 %v126, 0.044715
  %v135 = vmul.f32 %v127, 0.044715
  %v136 = vmul.f32 %v128, 0.044715
  %v137 = vmul.f32 %v129, 0.044715
  %v138 = vmul.f32 %v130, 0.044715
  %v139 = vmul.f32 %v131, 0.044715
  %v140 = vmul.f32 %v132, 0.044715
  %v141 = vmul.f32 %v133, 0.044715
  %v142 = vadd.f32 %v88, %v134
  %v143 = vadd.f32 %v91, %v135
  %v144 = vadd.f32 %v96, %v136
  %v145 = vadd.f32 %v99, %v137
  %v146 = vadd.f32 %v104, %v138
  %v147 = vadd.f32 %v107, %v139
  %v148 = vadd.f32 %v112, %v140
  %v149 = vadd.f32 %v115, %v141
  %v150 = vmul.f32 %v142, 0.7978846
  %v151 = vmul.f32 %v143, 0.7978846
  %v152 = vmul.f32 %v144, 0.7978846
  %v153 = vmul.f32 %v145, 0.7978846
  %v154 = vmul.f32 %v146, 0.7978846
  %v155 = vmul.f32 %v147, 0.7978846
  %v156 = vmul.f32 %v148, 0.7978846
  %v157 = vmul.f32 %v149, 0.7978846
  %v158 = vtanh.pop %v150
  %v159 = vtanh.pop %v151
  %v160 = vtanh.pop %v152
  %v161 = vtanh.pop %v153
  %v162 = vtanh.pop %v154
  %v163 = vtanh.pop %v155
  %v164 = vtanh.pop %v156
  %v165 = vtanh.pop %v157
  %v166 = vadd.f32 %v158, 1.0
  %v167 = vadd.f32 %v159, 1.0
  %v168 = vadd.f32 %v160, 1.0
  %v169 = vadd.f32 %v161, 1.0
  %v170 = vadd.f32 %v162, 1.0
  %v171 = vadd.f32 %v163, 1.0
  %v172 = vadd.f32 %v164, 1.0
  %v173 = vadd.f32 %v165, 1.0
  %v174 = vmul.f32 %v166, 0.5
  %v175 = vmul.f32 %v167, 0.5
  %v176 = vmul.f32 %v168, 0.5
  %v177 = vmul.f32 %v169, 0.5
  %v178 = vmul.f32 %v170, 0.5
  %v179 = vmul.f32 %v171, 0.5
  %v180 = vmul.f32 %v172, 0.5
  %v181 = vmul.f32 %v173, 0.5
  %v182 = vmul.f32 %v88, %v174
  %v183 = vmul.f32 %v91, %v175
  %v184 = vmul.f32 %v96, %v176
  %v185 = vmul.f32 %v99, %v177
  %v186 = vmul.f32 %v104, %v178
  %v187 = vmul.f32 %v107, %v179
  %v188 = vmul.f32 %v112, %v180
  %v189 = vmul.f32 %v115, %v181
  %v190 = vpack.c.bf16 %v183, %v182
  %v191 = vpack.c.bf16 %v185, %v184
  %v192 = vpack.c.bf16 %v187, %v186
  %v193 = vpack.c.bf16 %v189, %v188
  %v194 = vld [vmem:[%s1 + $0x8] sm:$0xf]
  %v195 = vld [vmem:[%s1 + $0xc] sm:$0xf]
  %v196 = vld [vmem:[%s1 + $0x10] sm:$0xf]
  %v197 = vld [vmem:[%s1 + $0x14] sm:$0xf]
  %v198 = vld [vmem:[%s1 + $0x18] sm:$0xf]
  %v199 = vld [vmem:[%s1 + $0x1c] sm:$0xf]
  %v200 = vld [vmem:[%s1 + $0x20] sm:$0xf]
  %v201 = vld [vmem:[%s1 + $0x24] sm:$0xf]
  %v202 = vld [vmem:[%s1 + $0x28] sm:$0xf]
  %v203 = vld [vmem:[%s1 + $0x2c] sm:$0xf]
  %v204 = vld [vmem:[%s1 + $0x30] sm:$0xf]
  %v205 = vld [vmem:[%s1 + $0x34] sm:$0xf]
  %v206 = vld [vmem:[%s1 + $0x38] sm:$0xf]
  %v207 = vld [vmem:[%s1 + $0x3c] sm:$0xf]
  %v208 = vld [vmem:[%s1 + $0x40] sm:$0xf]
  %v209 = vld [vmem:[%s1 + $0x44] sm:$0xf]
  %v210 = vlaneseq
  %v211 = vshrl.u32 %v210, 7
  %v212 = vsub.s32 1, %v211
  %v213 = vrot.slane %v15, %v212
  %v230 = vunpack.c.l.b16 %v194
  %v231 = vunpack.c.l.b16 %v195
  %v232 = vunpack.c.l.b16 %v196
  %v233 = vunpack.c.l.b16 %v197
  %v234 = vunpack.c.l.b16 %v198
  %v235 = vunpack.c.l.b16 %v199
  %v236 = vunpack.c.l.b16 %v200
  %v237 = vunpack.c.l.b16 %v201
  %v238 = vunpack.c.l.b16 %v202
  %v239 = vunpack.c.l.b16 %v203
  %v240 = vunpack.c.l.b16 %v204
  %v241 = vunpack.c.l.b16 %v205
  %v242 = vunpack.c.l.b16 %v206
  %v243 = vunpack.c.l.b16 %v207
  %v244 = vunpack.c.l.b16 %v208
  %v245 = vunpack.c.l.b16 %v209
  %v246 = vpack.c.b16 %v231, %v230
  %v247 = vpack.c.b16 %v233, %v232
  %v248 = vpack.c.b16 %v235, %v234
  %v249 = vpack.c.b16 %v237, %v236
  %v250 = vpack.c.b16 %v239, %v238
  %v251 = vpack.c.b16 %v241, %v240
  %v252 = vpack.c.b16 %v243, %v242
  %v253 = vpack.c.b16 %v245, %v244
  %262 = vmatprep.subr.bf16.mxu0 0
  %263 = vmatpush1.bf16.msra.mxu0 %v246
  %264 = vmatprep.subr.bf16.mxu0 0
  %265 = vmatpush1.bf16.msra.mxu0 %v247
  %266 = vmatprep.subr.bf16.mxu0 0
  %267 = vmatpush1.bf16.msra.mxu0 %v248
  %268 = vmatprep.subr.bf16.mxu0 0
  %269 = vmatpush1.bf16.msra.mxu0 %v249
  %270 = vmatprep.subr.bf16.mxu0 0
  %271 = vmatpush1.bf16.msra.mxu0 %v250
  %272 = vmatprep.subr.bf16.mxu0 0
  %273 = vmatpush1.bf16.msra.mxu0 %v251
  %274 = vmatprep.subr.bf16.mxu0 0
  %275 = vmatpush1.bf16.msra.mxu0 %v252
  %276 = vmatprep.subr.bf16.mxu0 0
  %277 = vmatpush1.bf16.msra.mxu0 %v253
  %278 = vmatprep.subr.bf16.mxu0 0
  %279 = vmatpush1.bf16.msra.mxu0 0
  %280 = vmatprep.subr.bf16.mxu0 0
  %281 = vmatpush1.bf16.msra.mxu0 0
  %282 = vmatprep.subr.bf16.mxu0 0
  %283 = vmatpush1.bf16.msra.mxu0 0
  %284 = vmatprep.subr.bf16.mxu0 0
  %285 = vmatpush1.bf16.msra.mxu0 0
  %286 = vmatprep.subr.bf16.mxu0 0
  %287 = vmatpush1.bf16.msra.mxu0 0
  %288 = vmatprep.subr.bf16.mxu0 0
  %289 = vmatpush1.bf16.msra.mxu0 0
  %290 = vmatprep.subr.bf16.mxu0 0
  %291 = vmatpush1.bf16.msra.mxu0 0
  %292 = vmatprep.subr.bf16.mxu0 0
  %293 = vmatpush1.bf16.msra.mxu0 0
  %294 = vmatprep.mubr.bf16.mxu0 0
  %295 = vmatmul.mubr.bf16.gmra.mrb[0].mxu0 %v190
  %v296 = vpop.f32.mrb[0].mxu0
  %v297 = vadd.f32 %v213, %v296
  %v298 = vpop.f32.mrb[0].mxu0
  %v299 = vpop.f32.mrb[0].mxu0
  %v300 = vadd.f32 %v213, %v299
  %v301 = vpop.f32.mrb[0].mxu0
  %302 = vmatprep.mubr.bf16.mxu0 0
  %303 = vmatmul.mubr.bf16.gmra.mrb[0].mxu0 %v191
  %v304 = vpop.f32.mrb[0].mxu0
  %v305 = vadd.f32 %v213, %v304
  %v306 = vpop.f32.mrb[0].mxu0
  %v307 = vpop.f32.mrb[0].mxu0
  %v308 = vadd.f32 %v213, %v307
  %v309 = vpop.f32.mrb[0].mxu0
  %310 = vmatprep.mubr.bf16.mxu0 0
  %311 = vmatmul.mubr.bf16.gmra.mrb[0].mxu0 %v192
  %v312 = vpop.f32.mrb[0].mxu0
  %v313 = vadd.f32 %v213, %v312
  %v314 = vpop.f32.mrb[0].mxu0
  %v315 = vpop.f32.mrb[0].mxu0
  %v316 = vadd.f32 %v213, %v315
  %v317 = vpop.f32.mrb[0].mxu0
  %318 = vmatprep.mubr.bf16.mxu0 0
  %319 = vmatmul.mubr.bf16.gmra.mrb[0].mxu0 %v193
  %v320 = vpop.f32.mrb[0].mxu0
  %v321 = vadd.f32 %v213, %v320
  %v322 = vpop.f32.mrb[0].mxu0
  %v323 = vpop.f32.mrb[0].mxu0
  %v324 = vadd.f32 %v213, %v323
  %v325 = vpop.f32.mrb[0].mxu0
  %326 = vdwg.mxu0
  %327 = vst [vmem:[%s3] sm:$0xff] %v297
  %328 = vst [vmem:[%s3 + $0x8] sm:$0xff] %v300
  %329 = vst [vmem:[%s3 + $0x10] sm:$0xff] %v305
  %330 = vst [vmem:[%s3 + $0x18] sm:$0xff] %v308
  %331 = vst [vmem:[%s3 + $0x20] sm:$0xff] %v313
  %332 = vst [vmem:[%s3 + $0x28] sm:$0xff] %v316
  %333 = vst [vmem:[%s3 + $0x30] sm:$0xff] %v321
  %334 = vst [vmem:[%s3 + $0x38] sm:$0xff] %v324
  // Predicated region
  $region14: #{_seg_embed_conv0.2} parent=0 // pred_check
    _
  $region15: #{_seg_embed_conv0.2} parent=0 // pred_check_branch
    %336 = sbr.rel (0) target = $region17
  $region16: #{_seg_embed_conv0.2} parent=0 // pred_region
    _
  $region17: #{_seg_embed_conv0.2} parent=0 // pred_fallthru
    _
  // Predicated region
  $region18: #{_seg_embed_conv0.2} parent=0 // pred_check
    _
  $region19: #{_seg_embed_conv0.2} parent=0 // pred_check_branch
    %338 = sbr.rel (0) target = $region21
  $region20: #{_seg_embed_conv0.2} parent=0 // pred_region
    _
  $region21: #{_seg_embed_conv0.2} parent=0 // pred_fallthru
    _

// kernel: _seg_embed_conv0.3
$region0: #{_seg_embed_conv0.3}
  #allocation0 [shape = 'u32[]', space=smem, size = 0x4, offset = 0x4, fixed_abs, tag = 'smem constant byte address 0x4 - core index']
  #allocation1 [shape = 'u32[144,128]{1,0:T(1,128)}', space=vmem, size = 0x12000, scoped, tag = 'internal scratch']
  %s0 = inlined_call_operand.vmem [shape: f32[16,32], index: 0, kind: input, shape index: {}]
  %s1 = inlined_call_operand.vmem [shape: f32[64,64], index: 1, kind: input, shape index: {}]
  %s2 = inlined_call_operand.vmem [shape: s32[1,64], index: 2, kind: input, shape index: {}]
  %s3 = inlined_call_operand.vmem [shape: bf16[352,128], index: 3, kind: input, shape index: {}]
  %s4 = inlined_call_operand.vmem [shape: f32[8,128], index: 4, kind: input, shape index: {}]
  %s5 = inlined_call_operand.vmem [shape: f32[16,128], index: 5, kind: output, shape index: {}]
  %s6 = sld [smem:[#allocation0]]
  $region30: #{_seg_embed_conv0.3} parent=0
    _
  %s8 = ssub.s32 1, %s6
  %s9 = scalar_select 0, %s8, %s6
  // Predicated region
  $region2: #{_seg_embed_conv0.3} parent=0 // pred_check
    _
  $region3: #{_seg_embed_conv0.3} parent=0 // pred_check_branch
    %11 = sbr.rel (0) target = $region5
  $region4: #{_seg_embed_conv0.3} parent=0 // pred_region
    _
  $region5: #{_seg_embed_conv0.3} parent=0 // pred_fallthru
    _
  // Predicated region
  $region6: #{_seg_embed_conv0.3} parent=0 // pred_check
    _
  $region7: #{_seg_embed_conv0.3} parent=0 // pred_check_branch
    %13 = sbr.rel (0) target = $region9
  $region8: #{_seg_embed_conv0.3} parent=0 // pred_region
    _
  $region9: #{_seg_embed_conv0.3} parent=0 // pred_fallthru
    _
  // Predicated region
  $region10: #{_seg_embed_conv0.3} parent=0 // pred_check
    _
  $region11: #{_seg_embed_conv0.3} parent=0 // pred_check_branch
    %15 = sbr.rel (0) target = $region13
  $region12: #{_seg_embed_conv0.3} parent=0 // pred_region
    _
  $region13: #{_seg_embed_conv0.3} parent=0 // pred_fallthru
    _
  // Predicated region
  $region14: #{_seg_embed_conv0.3} parent=0 // pred_check
    _
  $region15: #{_seg_embed_conv0.3} parent=0 // pred_check_branch
    %17 = sbr.rel (0) target = $region17
  $region16: #{_seg_embed_conv0.3} parent=0 // pred_region
    _
  $region17: #{_seg_embed_conv0.3} parent=0 // pred_fallthru
    _
  // Predicated region
  $region18: #{_seg_embed_conv0.3} parent=0 // pred_check
    _
  $region19: #{_seg_embed_conv0.3} parent=0 // pred_check_branch
    %19 = sbr.rel (0) target = $region21
  $region20: #{_seg_embed_conv0.3} parent=0 // pred_region
    _
  $region21: #{_seg_embed_conv0.3} parent=0 // pred_fallthru
    _
  %v21 = vld [vmem:[%s4] sm:$0xff]
  %v22 = vld [vmem:[%s1] sm:$0xff]
  %v23 = vld [vmem:[%s1 + $0x8] sm:$0xff]
  %v24 = vld [vmem:[%s1 + $0x10] sm:$0xff]
  %v25 = vld [vmem:[%s1 + $0x18] sm:$0xff]
  %v26 = vld [vmem:[%s1 + $0x20] sm:$0xff]
  %v27 = vld [vmem:[%s1 + $0x28] sm:$0xff]
  %v28 = vld [vmem:[%s1 + $0x30] sm:$0xff]
  %v29 = vld [vmem:[%s1 + $0x38] sm:$0xff]
  %v30 = vpack.c.bf16 %v23, %v22
  %v31 = vpack.c.bf16 %v25, %v24
  %v32 = vpack.c.bf16 %v27, %v26
  %v33 = vpack.c.bf16 %v29, %v28
  %v34 = vld [vmem:[%s3 + $0x10] sm:$0xf]
  %v35 = vld [vmem:[%s3 + $0x14] sm:$0xf]
  %v36 = vld [vmem:[%s3 + $0x18] sm:$0xf]
  %v37 = vld [vmem:[%s3 + $0x1c] sm:$0xf]
  %v38 = vld [vmem:[%s3 + $0x20] sm:$0xf]
  %v39 = vld [vmem:[%s3 + $0x24] sm:$0xf]
  %v40 = vld [vmem:[%s3 + $0x28] sm:$0xf]
  %v41 = vld [vmem:[%s3 + $0x2c] sm:$0xf]
  %v50 = vunpack.c.l.b16 %v34
  %v51 = vunpack.c.l.b16 %v35
  %v52 = vunpack.c.l.b16 %v36
  %v53 = vunpack.c.l.b16 %v37
  %v54 = vunpack.c.l.b16 %v38
  %v55 = vunpack.c.l.b16 %v39
  %v56 = vunpack.c.l.b16 %v40
  %v57 = vunpack.c.l.b16 %v41
  %v58 = vpack.c.b16 %v51, %v50
  %v59 = vpack.c.b16 %v53, %v52
  %v60 = vpack.c.b16 %v55, %v54
  %v61 = vpack.c.b16 %v57, %v56
  %vm66 = vcmask 523264
  %v68 = vsel %vm66, %v30, 0
  %v71 = vsel %vm66, %v31, 0
  %v74 = vsel %vm66, %v32, 0
  %v77 = vsel %vm66, %v33, 0
  %79 = vmatprep.subr.bf16.mxu0 0
  %80 = vmatpush1.bf16.msra.mxu0 %v58
  %81 = vmatprep.subr.bf16.mxu0 0
  %82 = vmatpush1.bf16.msra.mxu0 %v59
  %83 = vmatprep.subr.bf16.mxu0 0
  %84 = vmatpush1.bf16.msra.mxu0 %v60
  %85 = vmatprep.subr.bf16.mxu0 0
  %86 = vmatpush1.bf16.msra.mxu0 %v61
  %87 = vmatprep.subr.bf16.mxu0 0
  %88 = vmatpush1.bf16.msra.mxu0 0
  %89 = vmatprep.subr.bf16.mxu0 0
  %90 = vmatpush1.bf16.msra.mxu0 0
  %91 = vmatprep.subr.bf16.mxu0 0
  %92 = vmatpush1.bf16.msra.mxu0 0
  %93 = vmatprep.subr.bf16.mxu0 0
  %94 = vmatpush1.bf16.msra.mxu0 0
  %95 = vmatprep.subr.bf16.mxu0 0
  %96 = vmatpush1.bf16.msra.mxu0 0
  %97 = vmatprep.subr.bf16.mxu0 0
  %98 = vmatpush1.bf16.msra.mxu0 0
  %99 = vmatprep.subr.bf16.mxu0 0
  %100 = vmatpush1.bf16.msra.mxu0 0
  %101 = vmatprep.subr.bf16.mxu0 0
  %102 = vmatpush1.bf16.msra.mxu0 0
  %103 = vmatprep.subr.bf16.mxu0 0
  %104 = vmatpush1.bf16.msra.mxu0 0
  %105 = vmatprep.subr.bf16.mxu0 0
  %106 = vmatpush1.bf16.msra.mxu0 0
  %107 = vmatprep.subr.bf16.mxu0 0
  %108 = vmatpush1.bf16.msra.mxu0 0
  %109 = vmatprep.subr.bf16.mxu0 0
  %110 = vmatpush1.bf16.msra.mxu0 0
  %111 = vmatprep.mubr.bf16.mxu0 0
  %112 = vmatmul.mubr.bf16.gmra.mrb[0].mxu0 %v68
  %v113 = vpop.f32.mrb[0].mxu0
  %v114 = vadd.f32 0.0, %v113
  %v115 = vpop.f32.mrb[0].mxu0
  %v116 = vpop.f32.mrb[0].mxu0
  %v117 = vadd.f32 0.0, %v116
  %v118 = vpop.f32.mrb[0].mxu0
  %119 = vmatprep.mubr.bf16.mxu0 0
  %120 = vmatmul.mubr.bf16.gmra.mrb[0].mxu0 %v71
  %v121 = vpop.f32.mrb[0].mxu0
  %v122 = vadd.f32 0.0, %v121
  %v123 = vpop.f32.mrb[0].mxu0
  %v124 = vpop.f32.mrb[0].mxu0
  %v125 = vadd.f32 0.0, %v124
  %v126 = vpop.f32.mrb[0].mxu0
  %127 = vmatprep.mubr.bf16.mxu0 0
  %128 = vmatmul.mubr.bf16.gmra.mrb[0].mxu0 %v74
  %v129 = vpop.f32.mrb[0].mxu0
  %v130 = vadd.f32 0.0, %v129
  %v131 = vpop.f32.mrb[0].mxu0
  %v132 = vpop.f32.mrb[0].mxu0
  %v133 = vadd.f32 0.0, %v132
  %v134 = vpop.f32.mrb[0].mxu0
  %135 = vmatprep.mubr.bf16.mxu0 0
  %136 = vmatmul.mubr.bf16.gmra.mrb[0].mxu0 %v77
  %v137 = vpop.f32.mrb[0].mxu0
  %v138 = vadd.f32 0.0, %v137
  %v139 = vpop.f32.mrb[0].mxu0
  %v140 = vpop.f32.mrb[0].mxu0
  %v141 = vadd.f32 0.0, %v140
  %v142 = vpop.f32.mrb[0].mxu0
  %143 = vdwg.mxu0
  %v144 = vlaneseq
  %v145 = vshrl.u32 %v144, 7
  %v146 = vadd.s32 %v145, 8
  %v147 = vld [vmem:[%s2] sm:$0x1]
  %v148 = vlaneseq
  %v149 = vshrl.u32 %v148, 7
  %v150 = vsub.s32 0, %v149
  %v151 = vrot.slane %v147, %v150
  %vm152 = vcmp.eq.s32.totalorder %v145, %v151
  %vm153 = vcmp.eq.s32.totalorder %v146, %v151
  %v154 = vsel %vm152, 1, 0
  %v155 = vsel %vm153, 1, 0
  %v156 = vcvt.s32.f32 %v154
  %v157 = vcvt.s32.f32 %v155
  %v158 = vpack.c.bf16 %v157, %v156
  %v159 = vpack.c.bf16 %v117, %v114
  %v160 = vpack.c.bf16 %v125, %v122
  %v161 = vpack.c.bf16 %v133, %v130
  %v162 = vpack.c.bf16 %v141, %v138
  %v164 = vsel %vm66, %v158, 0
  %166 = vmatprep.subr.bf16.mxu0 0
  %167 = vmatpush1.bf16.msra.mxu0 %v159
  %168 = vmatprep.subr.bf16.mxu0 0
  %169 = vmatpush1.bf16.msra.mxu0 %v160
  %170 = vmatprep.subr.bf16.mxu0 0
  %171 = vmatpush1.bf16.msra.mxu0 %v161
  %172 = vmatprep.subr.bf16.mxu0 0
  %173 = vmatpush1.bf16.msra.mxu0 %v162
  %174 = vmatprep.subr.bf16.mxu0 0
  %175 = vmatpush1.bf16.msra.mxu0 0
  %176 = vmatprep.subr.bf16.mxu0 0
  %177 = vmatpush1.bf16.msra.mxu0 0
  %178 = vmatprep.subr.bf16.mxu0 0
  %179 = vmatpush1.bf16.msra.mxu0 0
  %180 = vmatprep.subr.bf16.mxu0 0
  %181 = vmatpush1.bf16.msra.mxu0 0
  %182 = vmatprep.subr.bf16.mxu0 0
  %183 = vmatpush1.bf16.msra.mxu0 0
  %184 = vmatprep.subr.bf16.mxu0 0
  %185 = vmatpush1.bf16.msra.mxu0 0
  %186 = vmatprep.subr.bf16.mxu0 0
  %187 = vmatpush1.bf16.msra.mxu0 0
  %188 = vmatprep.subr.bf16.mxu0 0
  %189 = vmatpush1.bf16.msra.mxu0 0
  %190 = vmatprep.subr.bf16.mxu0 0
  %191 = vmatpush1.bf16.msra.mxu0 0
  %192 = vmatprep.subr.bf16.mxu0 0
  %193 = vmatpush1.bf16.msra.mxu0 0
  %194 = vmatprep.subr.bf16.mxu0 0
  %195 = vmatpush1.bf16.msra.mxu0 0
  %196 = vmatprep.subr.bf16.mxu0 0
  %197 = vmatpush1.bf16.msra.mxu0 0
  %198 = vmatprep.mubr.bf16.mxu0 0
  %199 = vmatmul.mubr.bf16.gmra.mrb[0].mxu0 %v164
  %v200 = vpop.f32.mrb[0].mxu0
  %v201 = vadd.f32 0.0, %v200
  %v202 = vpop.f32.mrb[0].mxu0
  %v203 = vpop.f32.mrb[0].mxu0
  %v204 = vadd.f32 0.0, %v203
  %v205 = vpop.f32.mrb[0].mxu0
  %206 = vdwg.mxu0
  %v207 = vld [vmem:[%s0] sm:$0xff]
  %v208 = vld [vmem:[%s0 + $0x8] sm:$0xff]
  %v209 = vpack.c.bf16 %v208, %v207
  %v210 = vld [vmem:[%s3] sm:$0xf]
  %v211 = vld [vmem:[%s3 + $0x4] sm:$0xf]
  %v212 = vld [vmem:[%s3 + $0x8] sm:$0xf]
  %v213 = vld [vmem:[%s3 + $0xc] sm:$0xf]
  %v218 = vunpack.c.l.b16 %v210
  %v219 = vunpack.c.l.b16 %v211
  %v220 = vunpack.c.l.b16 %v212
  %v221 = vunpack.c.l.b16 %v213
  %v222 = vpack.c.b16 %v219, %v218
  %v223 = vpack.c.b16 %v221, %v220
  %vm226 = vcmask 261120
  %v228 = vsel %vm226, %v209, 0
  %230 = vmatprep.subr.bf16.mxu0 0
  %231 = vmatpush1.bf16.msra.mxu0 %v222
  %232 = vmatprep.subr.bf16.mxu0 0
  %233 = vmatpush1.bf16.msra.mxu0 %v223
  %234 = vmatprep.subr.bf16.mxu0 0
  %235 = vmatpush1.bf16.msra.mxu0 0
  %236 = vmatprep.subr.bf16.mxu0 0
  %237 = vmatpush1.bf16.msra.mxu0 0
  %238 = vmatprep.subr.bf16.mxu0 0
  %239 = vmatpush1.bf16.msra.mxu0 0
  %240 = vmatprep.subr.bf16.mxu0 0
  %241 = vmatpush1.bf16.msra.mxu0 0
  %242 = vmatprep.subr.bf16.mxu0 0
  %243 = vmatpush1.bf16.msra.mxu0 0
  %244 = vmatprep.subr.bf16.mxu0 0
  %245 = vmatpush1.bf16.msra.mxu0 0
  %246 = vmatprep.subr.bf16.mxu0 0
  %247 = vmatpush1.bf16.msra.mxu0 0
  %248 = vmatprep.subr.bf16.mxu0 0
  %249 = vmatpush1.bf16.msra.mxu0 0
  %250 = vmatprep.subr.bf16.mxu0 0
  %251 = vmatpush1.bf16.msra.mxu0 0
  %252 = vmatprep.subr.bf16.mxu0 0
  %253 = vmatpush1.bf16.msra.mxu0 0
  %254 = vmatprep.subr.bf16.mxu0 0
  %255 = vmatpush1.bf16.msra.mxu0 0
  %256 = vmatprep.subr.bf16.mxu0 0
  %257 = vmatpush1.bf16.msra.mxu0 0
  %258 = vmatprep.subr.bf16.mxu0 0
  %259 = vmatpush1.bf16.msra.mxu0 0
  %260 = vmatprep.subr.bf16.mxu0 0
  %261 = vmatpush1.bf16.msra.mxu0 0
  %262 = vmatprep.mubr.bf16.mxu0 0
  %263 = vmatmul.mubr.bf16.gmra.mrb[0].mxu0 %v228
  %v264 = vpop.f32.mrb[0].mxu0
  %v265 = vadd.f32 %v201, %v264
  %v266 = vpop.f32.mrb[0].mxu0
  %v267 = vpop.f32.mrb[0].mxu0
  %v268 = vadd.f32 %v204, %v267
  %v269 = vpop.f32.mrb[0].mxu0
  %270 = vdwg.mxu0
  %v271 = vlaneseq
  %v272 = vshrl.u32 %v271, 7
  %v273 = vsub.s32 0, %v272
  %v274 = vrot.slane %v21, %v273
  %v275 = vadd.f32 %v265, %v274
  %v276 = vadd.f32 %v268, %v274
  %v277 = vpack.c.bf16 %v276, %v275
  %v278 = vld [vmem:[%s3 + $0x30] sm:$0xf]
  %v279 = vld [vmem:[%s3 + $0x34] sm:$0xf]
  %v280 = vld [vmem:[%s3 + $0x38] sm:$0xf]
  %v281 = vld [vmem:[%s3 + $0x3c] sm:$0xf]
  %v282 = vld [vmem:[%s3 + $0x40] sm:$0xf]
  %v283 = vld [vmem:[%s3 + $0x44] sm:$0xf]
  %v284 = vld [vmem:[%s3 + $0x48] sm:$0xf]
  %v285 = vld [vmem:[%s3 + $0x4c] sm:$0xf]
  %v286 = vld [vmem:[%s3 + $0x50] sm:$0xf]
  %v287 = vld [vmem:[%s3 + $0x54] sm:$0xf]
  %v288 = vld [vmem:[%s3 + $0x58] sm:$0xf]
  %v289 = vld [vmem:[%s3 + $0x5c] sm:$0xf]
  %v290 = vld [vmem:[%s3 + $0x60] sm:$0xf]
  %v291 = vld [vmem:[%s3 + $0x64] sm:$0xf]
  %v292 = vld [vmem:[%s3 + $0x68] sm:$0xf]
  %v293 = vld [vmem:[%s3 + $0x6c] sm:$0xf]
  %v294 = vlaneseq
  %v295 = vshrl.u32 %v294, 7
  %v296 = vsub.s32 1, %v295
  %v297 = vrot.slane %v21, %v296
  %v314 = vunpack.c.l.b16 %v278
  %v315 = vunpack.c.l.b16 %v279
  %v316 = vunpack.c.l.b16 %v280
  %v317 = vunpack.c.l.b16 %v281
  %v318 = vunpack.c.l.b16 %v282
  %v319 = vunpack.c.l.b16 %v283
  %v320 = vunpack.c.l.b16 %v284
  %v321 = vunpack.c.l.b16 %v285
  %v322 = vunpack.c.l.b16 %v286
  %v323 = vunpack.c.l.b16 %v287
  %v324 = vunpack.c.l.b16 %v288
  %v325 = vunpack.c.l.b16 %v289
  %v326 = vunpack.c.l.b16 %v290
  %v327 = vunpack.c.l.b16 %v291
  %v328 = vunpack.c.l.b16 %v292
  %v329 = vunpack.c.l.b16 %v293
  %v330 = vpack.c.b16 %v315, %v314
  %v331 = vpack.c.b16 %v317, %v316
  %v332 = vpack.c.b16 %v319, %v318
  %v333 = vpack.c.b16 %v321, %v320
  %v334 = vpack.c.b16 %v323, %v322
  %v335 = vpack.c.b16 %v325, %v324
  %v336 = vpack.c.b16 %v327, %v326
  %v337 = vpack.c.b16 %v329, %v328
  %346 = vmatprep.subr.bf16.mxu0 0
  %347 = vmatpush1.bf16.msra.mxu0 %v330
  %348 = vmatprep.subr.bf16.mxu0 0
  %349 = vmatpush1.bf16.msra.mxu0 %v331
  %350 = vmatprep.subr.bf16.mxu0 0
  %351 = vmatpush1.bf16.msra.mxu0 %v332
  %352 = vmatprep.subr.bf16.mxu0 0
  %353 = vmatpush1.bf16.msra.mxu0 %v333
  %354 = vmatprep.subr.bf16.mxu0 0
  %355 = vmatpush1.bf16.msra.mxu0 %v334
  %356 = vmatprep.subr.bf16.mxu0 0
  %357 = vmatpush1.bf16.msra.mxu0 %v335
  %358 = vmatprep.subr.bf16.mxu0 0
  %359 = vmatpush1.bf16.msra.mxu0 %v336
  %360 = vmatprep.subr.bf16.mxu0 0
  %361 = vmatpush1.bf16.msra.mxu0 %v337
  %362 = vmatprep.subr.bf16.mxu0 0
  %363 = vmatpush1.bf16.msra.mxu0 0
  %364 = vmatprep.subr.bf16.mxu0 0
  %365 = vmatpush1.bf16.msra.mxu0 0
  %366 = vmatprep.subr.bf16.mxu0 0
  %367 = vmatpush1.bf16.msra.mxu0 0
  %368 = vmatprep.subr.bf16.mxu0 0
  %369 = vmatpush1.bf16.msra.mxu0 0
  %370 = vmatprep.subr.bf16.mxu0 0
  %371 = vmatpush1.bf16.msra.mxu0 0
  %372 = vmatprep.subr.bf16.mxu0 0
  %373 = vmatpush1.bf16.msra.mxu0 0
  %374 = vmatprep.subr.bf16.mxu0 0
  %375 = vmatpush1.bf16.msra.mxu0 0
  %376 = vmatprep.subr.bf16.mxu0 0
  %377 = vmatpush1.bf16.msra.mxu0 0
  %378 = vmatprep.mubr.bf16.mxu0 0
  %379 = vmatmul.mubr.bf16.gmra.mrb[0].mxu0 %v277
  %v380 = vpop.f32.mrb[0].mxu0
  %v381 = vadd.f32 %v297, %v380
  %v382 = vpop.f32.mrb[0].mxu0
  %v383 = vpop.f32.mrb[0].mxu0
  %v384 = vadd.f32 %v297, %v383
  %v385 = vpop.f32.mrb[0].mxu0
  %386 = vdwg.mxu0
  %v387 = vmul.f32 %v381, %v381
  %v388 = vmul.f32 %v384, %v384
  %v389 = vmul.f32 %v381, %v387
  %v390 = vmul.f32 %v384, %v388
  %v391 = vmul.f32 %v389, 0.044715
  %v392 = vmul.f32 %v390, 0.044715
  %v393 = vadd.f32 %v381, %v391
  %v394 = vadd.f32 %v384, %v392
  %v395 = vmul.f32 %v393, 0.7978846
  %v396 = vmul.f32 %v394, 0.7978846
  %v397 = vtanh.pop %v395
  %v398 = vtanh.pop %v396
  %v399 = vadd.f32 %v397, 1.0
  %v400 = vadd.f32 %v398, 1.0
  %v401 = vmul.f32 %v399, 0.5
  %v402 = vmul.f32 %v400, 0.5
  %v403 = vmul.f32 %v381, %v401
  %v404 = vmul.f32 %v384, %v402
  %v405 = vpack.c.bf16 %v404, %v403
  %v406 = vld [vmem:[%s3 + $0x70] sm:$0xf]
  %v407 = vld [vmem:[%s3 + $0x74] sm:$0xf]
  %v408 = vld [vmem:[%s3 + $0x78] sm:$0xf]
  %v409 = vld [vmem:[%s3 + $0x7c] sm:$0xf]
  %v410 = vld [vmem:[%s3 + $0x80] sm:$0xf]
  %v411 = vld [vmem:[%s3 + $0x84] sm:$0xf]
  %v412 = vld [vmem:[%s3 + $0x88] sm:$0xf]
  %v413 = vld [vmem:[%s3 + $0x8c] sm:$0xf]
  %v414 = vld [vmem:[%s3 + $0x90] sm:$0xf]
  %v415 = vld [vmem:[%s3 + $0x94] sm:$0xf]
  %v416 = vld [vmem:[%s3 + $0x98] sm:$0xf]
  %v417 = vld [vmem:[%s3 + $0x9c] sm:$0xf]
  %v418 = vld [vmem:[%s3 + $0xa0] sm:$0xf]
  %v419 = vld [vmem:[%s3 + $0xa4] sm:$0xf]
  %v420 = vld [vmem:[%s3 + $0xa8] sm:$0xf]
  %v421 = vld [vmem:[%s3 + $0xac] sm:$0xf]
  %v422 = vlaneseq
  %v423 = vshrl.u32 %v422, 7
  %v424 = vsub.s32 2, %v423
  %v425 = vrot.slane %v21, %v424
  %v442 = vunpack.c.l.b16 %v406
  %v443 = vunpack.c.l.b16 %v407
  %v444 = vunpack.c.l.b16 %v408
  %v445 = vunpack.c.l.b16 %v409
  %v446 = vunpack.c.l.b16 %v410
  %v447 = vunpack.c.l.b16 %v411
  %v448 = vunpack.c.l.b16 %v412
  %v449 = vunpack.c.l.b16 %v413
  %v450 = vunpack.c.l.b16 %v414
  %v451 = vunpack.c.l.b16 %v415
  %v452 = vunpack.c.l.b16 %v416
  %v453 = vunpack.c.l.b16 %v417
  %v454 = vunpack.c.l.b16 %v418
  %v455 = vunpack.c.l.b16 %v419
  %v456 = vunpack.c.l.b16 %v420
  %v457 = vunpack.c.l.b16 %v421
  %v458 = vpack.c.b16 %v443, %v442
  %v459 = vpack.c.b16 %v445, %v444
  %v460 = vpack.c.b16 %v447, %v446
  %v461 = vpack.c.b16 %v449, %v448
  %v462 = vpack.c.b16 %v451, %v450
  %v463 = vpack.c.b16 %v453, %v452
  %v464 = vpack.c.b16 %v455, %v454
  %v465 = vpack.c.b16 %v457, %v456
  %474 = vmatprep.subr.bf16.mxu0 0
  %475 = vmatpush1.bf16.msra.mxu0 %v458
  %476 = vmatprep.subr.bf16.mxu0 0
  %477 = vmatpush1.bf16.msra.mxu0 %v459
  %478 = vmatprep.subr.bf16.mxu0 0
  %479 = vmatpush1.bf16.msra.mxu0 %v460
  %480 = vmatprep.subr.bf16.mxu0 0
  %481 = vmatpush1.bf16.msra.mxu0 %v461
  %482 = vmatprep.subr.bf16.mxu0 0
  %483 = vmatpush1.bf16.msra.mxu0 %v462
  %484 = vmatprep.subr.bf16.mxu0 0
  %485 = vmatpush1.bf16.msra.mxu0 %v463
  %486 = vmatprep.subr.bf16.mxu0 0
  %487 = vmatpush1.bf16.msra.mxu0 %v464
  %488 = vmatprep.subr.bf16.mxu0 0
  %489 = vmatpush1.bf16.msra.mxu0 %v465
  %490 = vmatprep.subr.bf16.mxu0 0
  %491 = vmatpush1.bf16.msra.mxu0 0
  %492 = vmatprep.subr.bf16.mxu0 0
  %493 = vmatpush1.bf16.msra.mxu0 0
  %494 = vmatprep.subr.bf16.mxu0 0
  %495 = vmatpush1.bf16.msra.mxu0 0
  %496 = vmatprep.subr.bf16.mxu0 0
  %497 = vmatpush1.bf16.msra.mxu0 0
  %498 = vmatprep.subr.bf16.mxu0 0
  %499 = vmatpush1.bf16.msra.mxu0 0
  %500 = vmatprep.subr.bf16.mxu0 0
  %501 = vmatpush1.bf16.msra.mxu0 0
  %502 = vmatprep.subr.bf16.mxu0 0
  %503 = vmatpush1.bf16.msra.mxu0 0
  %504 = vmatprep.subr.bf16.mxu0 0
  %505 = vmatpush1.bf16.msra.mxu0 0
  %506 = vmatprep.mubr.bf16.mxu0 0
  %507 = vmatmul.mubr.bf16.gmra.mrb[0].mxu0 %v405
  %v508 = vpop.f32.mrb[0].mxu0
  %v509 = vadd.f32 %v425, %v508
  %v510 = vpop.f32.mrb[0].mxu0
  %v511 = vpop.f32.mrb[0].mxu0
  %v512 = vadd.f32 %v425, %v511
  %v513 = vpop.f32.mrb[0].mxu0
  %514 = vdwg.mxu0
  %515 = vst [vmem:[%s5] sm:$0xff] %v509
  %516 = vst [vmem:[%s5 + $0x8] sm:$0xff] %v512
  // Predicated region
  $region22: #{_seg_embed_conv0.3} parent=0 // pred_check
    _
  $region23: #{_seg_embed_conv0.3} parent=0 // pred_check_branch
    %518 = sbr.rel (0) target = $region25
  $region24: #{_seg_embed_conv0.3} parent=0 // pred_region
    _
  $region25: #{_seg_embed_conv0.3} parent=0 // pred_fallthru
    _
  // Predicated region
  $region26: #{_seg_embed_conv0.3} parent=0 // pred_check
    _
  $region27: #{_seg_embed_conv0.3} parent=0 // pred_check_branch
    %520 = sbr.rel (0) target = $region29
  $region28: #{_seg_embed_conv0.3} parent=0 // pred_region
    _
  $region29: #{_seg_embed_conv0.3} parent=0 // pred_fallthru
    _

</llo_original>
